<compile_context>
chip_gen: v5e
topology: v5e:2x2
jax: 0.10.0
libtpu: 0.0.40
codegen_flags: <defaults>
</compile_context>

<pallas_src>
import functools

import jax
import jax.numpy as jnp
from jax.experimental import pallas as pl
from jax.experimental.pallas import tpu as pltpu


def _cdiv(a, b):
    return -(-a // b)


def _round_up(a, m):
    return _cdiv(a, m) * m


def _pyramid_loss_kernel(inv_n, x1_ref, l1_ref, x2_ref, l2_ref, x3_ref, l3_ref,
                         out_ref, acc_ref):
    i = pl.program_id(0)

    @pl.when(i == 0)
    def _init():
        acc_ref[0] = jnp.float32(0.0)

    def level_sum(x_ref, l_ref):
        d = jnp.abs(x_ref[...].astype(jnp.float32)
                    - l_ref[...].astype(jnp.float32))
        # Reduce leading (batch, channel) axes with plain VALU vreg adds first;
        # the single cross-sublane/lane XLU reduce per level per step is hidden
        # under the streaming DMA (kernel is HBM-bound).
        return jnp.sum(jnp.sum(d, axis=(0, 1)))

    step = (level_sum(x1_ref, l1_ref)
            + 2.0 * level_sum(x2_ref, l2_ref)
            + 4.0 * level_sum(x3_ref, l3_ref))
    acc_ref[0] += step

    @pl.when(i == pl.num_programs(0) - 1)
    def _finalize():
        out_ref[0, 0] = acc_ref[0] * inv_n


def pyramid_loss(x_1, x_2, x_3, label_1, label_2, label_3,
                 *, target_step_bytes=12 * 1024 * 1024):
    """JAX wrapper matching Pyramid_Loss.forward. Inputs are NCHW arrays."""
    levels = ((x_1, label_1), (x_2, label_2), (x_3, label_3))
    for x, l in levels:
        assert x.shape == l.shape and x.ndim == 4
    n = x_1.shape[0]
    assert x_2.shape[0] == n and x_3.shape[0] == n

    # VMEM footprint of one batch sample across all six tiles (accounts for
    # sublane/lane padding of the trailing (H, W) dims).
    def _padded_sample_bytes(a):
        _, c, h, w = a.shape
        return c * _round_up(h, 8) * _round_up(w, 128) * int(a.dtype.itemsize)

    per_sample = sum(_padded_sample_bytes(a) for pair in levels for a in pair)
    bn_cap = max(1, min(n, target_step_bytes // max(per_sample, 1)))
    # Largest divisor of N that fits the budget -> every block is full
    # (no ragged-tail masking), blocks stay as large as the VMEM budget allows.
    bn = 1
    for d in range(int(bn_cap), 0, -1):
        if n % d == 0:
            bn = d
            break
    nb = n // bn

    def _block_spec(a):
        _, c, h, w = a.shape
        return pl.BlockSpec((bn, c, h, w), lambda i: (i, 0, 0, 0))

    in_specs = [_block_spec(a) for pair in levels for a in pair]

    total_pred_elems = sum(int(x.size) for x, _ in levels)
    itemsize = int(x_1.dtype.itemsize)
    cost = pl.CostEstimate(
        flops=3 * total_pred_elems,
        transcendentals=0,
        bytes_accessed=2 * total_pred_elems * itemsize + 4,
    )

    kernel = functools.partial(_pyramid_loss_kernel, 1.0 / float(n))

    out = pl.pallas_call(
        kernel,
        grid=(nb,),
        in_specs=in_specs,
        out_specs=pl.BlockSpec(memory_space=pltpu.MemorySpace.SMEM),
        out_shape=jax.ShapeDtypeStruct((1, 1), jnp.float32),
        scratch_shapes=[pltpu.SMEM((1,), jnp.float32)],
        compiler_params=pltpu.CompilerParams(
            dimension_semantics=("arbitrary",),
            vmem_limit_bytes=32 * 1024 * 1024,
        ),
        cost_estimate=cost,
    )(x_1, label_1, x_2, label_2, x_3, label_3)

    # Match the reference's return dtype (scalar).
    return out[0, 0].astype(x_1.dtype)


def _reference(x_1, x_2, x_3, l_1, l_2, l_3):
    loss1 = jnp.mean(jnp.sum(jnp.abs(x_1 - l_1), axis=(1, 2, 3)), axis=0)
    loss2 = jnp.mean(2.0 * jnp.sum(jnp.abs(x_2 - l_2), axis=(1, 2, 3)), axis=0)
    loss3 = jnp.mean(4.0 * jnp.sum(jnp.abs(x_3 - l_3), axis=(1, 2, 3)), axis=0)
    return loss1 + loss2 + loss3


if __name__ == "__main__":
    key = jax.random.PRNGKey(0)
    k1, k2, k3, k4, k5, k6 = jax.random.split(key, 6)

    # Pyramid levels: full / half / quarter resolution.
    B, C = 2, 4
    x1 = jax.random.normal(k1, (B, C, 16, 16), dtype=jnp.float32)
    l1 = jax.random.normal(k2, (B, C, 16, 16), dtype=jnp.float32)
    x2 = jax.random.normal(k3, (B, C, 8, 8), dtype=jnp.float32)
    l2 = jax.random.normal(k4, (B, C, 8, 8), dtype=jnp.float32)
    x3 = jax.random.normal(k5, (B, C, 4, 4), dtype=jnp.float32)
    l3 = jax.random.normal(k6, (B, C, 4, 4), dtype=jnp.float32)

    loss = pyramid_loss(x1, x2, x3, l1, l2, l3)
    loss = jax.block_until_ready(loss)

    ref = _reference(x1, x2, x3, l1, l2, l3)
    assert jnp.allclose(loss, ref, rtol=1e-5, atol=1e-5), (loss, ref)

    print("KERNEL_OK")
</pallas_src>

<mosaic_0001>
module attributes {stable_mosaic.version = 11 : i64} {
  func.func @_pyramid_loss_kernel(%arg0: i32, %arg1: memref<2x4x16x16xf32, #tpu.memory_space<vmem>>, %arg2: memref<2x4x16x16xf32, #tpu.memory_space<vmem>>, %arg3: memref<2x4x8x8xf32, #tpu.memory_space<vmem>>, %arg4: memref<2x4x8x8xf32, #tpu.memory_space<vmem>>, %arg5: memref<2x4x4x4xf32, #tpu.memory_space<vmem>>, %arg6: memref<2x4x4x4xf32, #tpu.memory_space<vmem>>, %arg7: memref<1x1xf32, #tpu.memory_space<smem>>, %arg8: memref<1xf32, #tpu.memory_space<smem>>) attributes {dimension_semantics = [#tpu.dimension_semantics<arbitrary>], iteration_bounds = array<i64: 1>, scalar_prefetch = 0 : i64, scratch_operands = 1 : i64, tpu.core_type = #tpu.core_type<tc>, window_params = [{transform_indices = @transform_0, window_bounds = array<i64: 2, 4, 16, 16>}, {transform_indices = @transform_1, window_bounds = array<i64: 2, 4, 16, 16>}, {transform_indices = @transform_2, window_bounds = array<i64: 2, 4, 8, 8>}, {transform_indices = @transform_3, window_bounds = array<i64: 2, 4, 8, 8>}, {transform_indices = @transform_4, window_bounds = array<i64: 2, 4, 4, 4>}, {transform_indices = @transform_5, window_bounds = array<i64: 2, 4, 4, 4>}, {transform_indices = @transform_6, window_bounds = array<i64: 1, 1>}]} {
    %c0_i32 = arith.constant 0 : i32
    %0 = arith.cmpi eq, %arg0, %c0_i32 : i32
    %1 = arith.extui %0 : i1 to i32
    %c0_i32_0 = arith.constant 0 : i32
    %2 = arith.cmpi ne, %1, %c0_i32_0 : i32
    scf.if %2 {
      %cst_35 = arith.constant 0.000000e+00 : f32
      %c0_36 = arith.constant 0 : index
      %40 = memref.load %arg8[%c0_36] : memref<1xf32, #tpu.memory_space<smem>>
      memref.store %cst_35, %arg8[%c0_36] : memref<1xf32, #tpu.memory_space<smem>>
    } else {
    }
    %c0 = arith.constant 0 : index
    %c0_1 = arith.constant 0 : index
    %c0_2 = arith.constant 0 : index
    %c0_3 = arith.constant 0 : index
    %3 = vector.load %arg1[%c0, %c0_1, %c0_2, %c0_3] : memref<2x4x16x16xf32, #tpu.memory_space<vmem>>, vector<2x4x16x16xf32>
    %c0_4 = arith.constant 0 : index
    %c0_5 = arith.constant 0 : index
    %c0_6 = arith.constant 0 : index
    %c0_7 = arith.constant 0 : index
    %4 = vector.load %arg2[%c0_4, %c0_5, %c0_6, %c0_7] : memref<2x4x16x16xf32, #tpu.memory_space<vmem>>, vector<2x4x16x16xf32>
    %5 = arith.subf %3, %4 : vector<2x4x16x16xf32>
    %6 = math.absf %5 : vector<2x4x16x16xf32>
    %cst = arith.constant dense<0.000000e+00> : vector<16x16xf32>
    %7 = vector.multi_reduction <add>, %6, %cst [0, 1] : vector<2x4x16x16xf32> to vector<16x16xf32>
    %8 = vector.shape_cast %7 : vector<16x16xf32> to vector<1x16x16xf32>
    %cst_8 = arith.constant dense<0.000000e+00> : vector<1xf32>
    %9 = vector.multi_reduction <add>, %8, %cst_8 [1, 2] : vector<1x16x16xf32> to vector<1xf32>
    %10 = vector.shape_cast %9 : vector<1xf32> to vector<1x1x1xf32>
    %11 = vector.extract %10[0, 0, 0] : f32 from vector<1x1x1xf32>
    %c0_9 = arith.constant 0 : index
    %c0_10 = arith.constant 0 : index
    %c0_11 = arith.constant 0 : index
    %c0_12 = arith.constant 0 : index
    %12 = vector.load %arg3[%c0_9, %c0_10, %c0_11, %c0_12] : memref<2x4x8x8xf32, #tpu.memory_space<vmem>>, vector<2x4x8x8xf32>
    %c0_13 = arith.constant 0 : index
    %c0_14 = arith.constant 0 : index
    %c0_15 = arith.constant 0 : index
    %c0_16 = arith.constant 0 : index
    %13 = vector.load %arg4[%c0_13, %c0_14, %c0_15, %c0_16] : memref<2x4x8x8xf32, #tpu.memory_space<vmem>>, vector<2x4x8x8xf32>
    %14 = arith.subf %12, %13 : vector<2x4x8x8xf32>
    %15 = math.absf %14 : vector<2x4x8x8xf32>
    %cst_17 = arith.constant dense<0.000000e+00> : vector<8x8xf32>
    %16 = vector.multi_reduction <add>, %15, %cst_17 [0, 1] : vector<2x4x8x8xf32> to vector<8x8xf32>
    %17 = vector.shape_cast %16 : vector<8x8xf32> to vector<1x8x8xf32>
    %cst_18 = arith.constant dense<0.000000e+00> : vector<1xf32>
    %18 = vector.multi_reduction <add>, %17, %cst_18 [1, 2] : vector<1x8x8xf32> to vector<1xf32>
    %19 = vector.shape_cast %18 : vector<1xf32> to vector<1x1x1xf32>
    %20 = vector.extract %19[0, 0, 0] : f32 from vector<1x1x1xf32>
    %cst_19 = arith.constant 2.000000e+00 : f32
    %21 = arith.mulf %cst_19, %20 : f32
    %22 = arith.addf %11, %21 : f32
    %c0_20 = arith.constant 0 : index
    %c0_21 = arith.constant 0 : index
    %c0_22 = arith.constant 0 : index
    %c0_23 = arith.constant 0 : index
    %23 = vector.load %arg5[%c0_20, %c0_21, %c0_22, %c0_23] : memref<2x4x4x4xf32, #tpu.memory_space<vmem>>, vector<2x4x4x4xf32>
    %c0_24 = arith.constant 0 : index
    %c0_25 = arith.constant 0 : index
    %c0_26 = arith.constant 0 : index
    %c0_27 = arith.constant 0 : index
    %24 = vector.load %arg6[%c0_24, %c0_25, %c0_26, %c0_27] : memref<2x4x4x4xf32, #tpu.memory_space<vmem>>, vector<2x4x4x4xf32>
    %25 = arith.subf %23, %24 : vector<2x4x4x4xf32>
    %26 = math.absf %25 : vector<2x4x4x4xf32>
    %cst_28 = arith.constant dense<0.000000e+00> : vector<4x4xf32>
    %27 = vector.multi_reduction <add>, %26, %cst_28 [0, 1] : vector<2x4x4x4xf32> to vector<4x4xf32>
    %28 = vector.shape_cast %27 : vector<4x4xf32> to vector<1x4x4xf32>
    %cst_29 = arith.constant dense<0.000000e+00> : vector<1xf32>
    %29 = vector.multi_reduction <add>, %28, %cst_29 [1, 2] : vector<1x4x4xf32> to vector<1xf32>
    %30 = vector.shape_cast %29 : vector<1xf32> to vector<1x1x1xf32>
    %31 = vector.extract %30[0, 0, 0] : f32 from vector<1x1x1xf32>
    %cst_30 = arith.constant 4.000000e+00 : f32
    %32 = arith.mulf %cst_30, %31 : f32
    %33 = arith.addf %22, %32 : f32
    %c0_31 = arith.constant 0 : index
    %34 = memref.load %arg8[%c0_31] : memref<1xf32, #tpu.memory_space<smem>>
    %35 = arith.addf %34, %33 : f32
    %c0_32 = arith.constant 0 : index
    %36 = memref.load %arg8[%c0_32] : memref<1xf32, #tpu.memory_space<smem>>
    memref.store %35, %arg8[%c0_32] : memref<1xf32, #tpu.memory_space<smem>>
    %c0_i32_33 = arith.constant 0 : i32
    %37 = arith.cmpi eq, %arg0, %c0_i32_33 : i32
    %38 = arith.extui %37 : i1 to i32
    %c0_i32_34 = arith.constant 0 : i32
    %39 = arith.cmpi ne, %38, %c0_i32_34 : i32
    scf.if %39 {
      %c0_35 = arith.constant 0 : index
      %40 = memref.load %arg8[%c0_35] : memref<1xf32, #tpu.memory_space<smem>>
      %cst_36 = arith.constant 5.000000e-01 : f32
      %41 = arith.mulf %40, %cst_36 : f32
      %c0_37 = arith.constant 0 : index
      %c0_38 = arith.constant 0 : index
      %42 = memref.load %arg7[%c0_37, %c0_38] : memref<1x1xf32, #tpu.memory_space<smem>>
      memref.store %41, %arg7[%c0_37, %c0_38] : memref<1x1xf32, #tpu.memory_space<smem>>
    } else {
    }
    return
  }
  func.func @transform_0(%arg0: i32) -> (i32, i32, i32, i32) {
    %c0_i32 = arith.constant 0 : i32
    %c0_i32_0 = arith.constant 0 : i32
    %c0_i32_1 = arith.constant 0 : i32
    %c0_i32_2 = arith.constant 0 : i32
    return %arg0, %c0_i32, %c0_i32_0, %c0_i32_1 : i32, i32, i32, i32
  }
  func.func @transform_1(%arg0: i32) -> (i32, i32, i32, i32) {
    %c0_i32 = arith.constant 0 : i32
    %c0_i32_0 = arith.constant 0 : i32
    %c0_i32_1 = arith.constant 0 : i32
    %c0_i32_2 = arith.constant 0 : i32
    return %arg0, %c0_i32, %c0_i32_0, %c0_i32_1 : i32, i32, i32, i32
  }
  func.func @transform_2(%arg0: i32) -> (i32, i32, i32, i32) {
    %c0_i32 = arith.constant 0 : i32
    %c0_i32_0 = arith.constant 0 : i32
    %c0_i32_1 = arith.constant 0 : i32
    %c0_i32_2 = arith.constant 0 : i32
    return %arg0, %c0_i32, %c0_i32_0, %c0_i32_1 : i32, i32, i32, i32
  }
  func.func @transform_3(%arg0: i32) -> (i32, i32, i32, i32) {
    %c0_i32 = arith.constant 0 : i32
    %c0_i32_0 = arith.constant 0 : i32
    %c0_i32_1 = arith.constant 0 : i32
    %c0_i32_2 = arith.constant 0 : i32
    return %arg0, %c0_i32, %c0_i32_0, %c0_i32_1 : i32, i32, i32, i32
  }
  func.func @transform_4(%arg0: i32) -> (i32, i32, i32, i32) {
    %c0_i32 = arith.constant 0 : i32
    %c0_i32_0 = arith.constant 0 : i32
    %c0_i32_1 = arith.constant 0 : i32
    %c0_i32_2 = arith.constant 0 : i32
    return %arg0, %c0_i32, %c0_i32_0, %c0_i32_1 : i32, i32, i32, i32
  }
  func.func @transform_5(%arg0: i32) -> (i32, i32, i32, i32) {
    %c0_i32 = arith.constant 0 : i32
    %c0_i32_0 = arith.constant 0 : i32
    %c0_i32_1 = arith.constant 0 : i32
    %c0_i32_2 = arith.constant 0 : i32
    return %arg0, %c0_i32, %c0_i32_0, %c0_i32_1 : i32, i32, i32, i32
  }
  func.func @transform_6(%arg0: i32) -> (i32, i32) {
    %c0_i32 = arith.constant 0 : i32
    %c0_i32_0 = arith.constant 0 : i32
    %c0_i32_1 = arith.constant 0 : i32
    return %c0_i32, %c0_i32_0 : i32, i32
  }
}

</mosaic_0001>

<llo_original>
// kernel: tpu_custom_call.1
$region0: #{tpu_custom_call.1}
  #allocation0 [shape = 'u32[]', space=smem, size = 0x4, offset = 0x4, fixed_abs, tag = 'smem constant byte address 0x4 - core index']
  #allocation1 [shape = 'u32[72,128]{1,0:T(1,128)}', space=vmem, size = 0x9000, scoped, tag = 'internal scratch']
  #allocation2 [shape = 'f32[1]{0:T(128)}', space=smem, size = 0x200, scoped, tag = 'scratch operand']
  %s0 = inlined_call_operand.hbm [shape: f32[2,4,16,16], index: 0, kind: input, shape index: {}]
  %s1 = inlined_call_operand.hbm [shape: f32[2,4,16,16], index: 1, kind: input, shape index: {}]
  %s2 = inlined_call_operand.hbm [shape: f32[2,4,8,8], index: 2, kind: input, shape index: {}]
  %s3 = inlined_call_operand.hbm [shape: f32[2,4,8,8], index: 3, kind: input, shape index: {}]
  %s4 = inlined_call_operand.hbm [shape: f32[2,4,4,4], index: 4, kind: input, shape index: {}]
  %s5 = inlined_call_operand.hbm [shape: f32[2,4,4,4], index: 5, kind: input, shape index: {}]
  %s6 = inlined_call_operand.hbm [shape: f32[1,1], index: 6, kind: output, shape index: {}]
  %s7 = sld [smem:[#allocation0]]
  $region66: #{tpu_custom_call.1} parent=0
    _
  %s9 = ssub.s32 1, %s7
  %s10 = scalar_select 0, %s9, %s7
  $region1: #{tpu_custom_call.1} parent=0
    #allocation3 [shape = 'u8[65536]{0}', space=vmem, size = 0x10000, scoped, tag = 'input window, operand 0, single buffered']
    #allocation4 [shape = 's32[1]{0}', space=sflag, size = 0x4, scoped, tag = 'scoped memory for tpu_custom_call.1']
    #allocation5 [shape = 's32[1]{0}', space=sflag, size = 0x4, scoped, tag = 'scoped memory for tpu_custom_call.1']
    #allocation6 [shape = 'u8[65536]{0}', space=vmem, size = 0x10000, scoped, tag = 'input window, operand 1, single buffered']
    #allocation7 [shape = 's32[1]{0}', space=sflag, size = 0x4, scoped, tag = 'scoped memory for tpu_custom_call.1']
    #allocation8 [shape = 'u8[32768]{0}', space=vmem, size = 0x8000, scoped, tag = 'input window, operand 2, single buffered']
    #allocation9 [shape = 'u8[32768]{0}', space=vmem, size = 0x8000, scoped, tag = 'input window, operand 3, single buffered']
    #allocation10 [shape = 's32[1]{0}', space=sflag, size = 0x4, scoped, tag = 'scoped memory for tpu_custom_call.1']
    #allocation11 [shape = 'u8[16384]{0}', space=vmem, size = 0x4000, scoped, tag = 'input window, operand 4, single buffered']
    #allocation12 [shape = 'u8[16384]{0}', space=vmem, size = 0x4000, scoped, tag = 'input window, operand 5, single buffered']
    #allocation13 [shape = 's32[1]{0}', space=sflag, size = 0x4, scoped, tag = 'scoped memory for tpu_custom_call.1']
    #allocation14 [shape = 'u8[512]{0}', space=smem, size = 0x200, scoped, tag = 'output window, operand 0, single buffered']
    %11 = vsyncpa [#allocation4], 0
    %12 = vsyncpa [#allocation7], 0
    %13 = vsyncpa [#allocation10], 0
    %14 = vsyncpa [#allocation13], 0
    %15 = vsyncpa [#allocation5], 0
    // Predicated region
    $region2: #{tpu_custom_call.1} parent=1 // pred_check
      _
    $region3: #{tpu_custom_call.1} parent=1 // pred_check_branch
      %17 = sbr.rel (0) target = $region5
    $region4: #{tpu_custom_call.1} parent=1 // pred_region
      %19 = vsyncadd [#allocation4], 0
      %s20 = sshll.u32 %s0, 4
      %s21 = int_to_ptr.hbm [resolvable:$true] %s20
      %s22 = sshll.u32 [#allocation3], 4
      %s23 = int_to_ptr.vmem [resolvable:$true] %s22
      %28 = dma.hbm_to_vmem [thread:$0]  %s21, 2048, %s23, [#allocation4], 128, 128, 8
    $region5: #{tpu_custom_call.1} parent=1 // pred_fallthru
      _
    // Predicated region
    $region6: #{tpu_custom_call.1} parent=1 // pred_check
      _
    $region7: #{tpu_custom_call.1} parent=1 // pred_check_branch
      %30 = sbr.rel (0) target = $region9
    $region8: #{tpu_custom_call.1} parent=1 // pred_region
      %32 = vsyncadd [#allocation7], 0
      %s33 = sshll.u32 %s1, 4
      %s34 = int_to_ptr.hbm [resolvable:$true] %s33
      %s35 = sshll.u32 [#allocation6], 4
      %s36 = int_to_ptr.vmem [resolvable:$true] %s35
      %41 = dma.hbm_to_vmem [thread:$0]  %s34, 2048, %s36, [#allocation7], 128, 128, 8
    $region9: #{tpu_custom_call.1} parent=1 // pred_fallthru
      _
    // Predicated region
    $region10: #{tpu_custom_call.1} parent=1 // pred_check
      _
    $region11: #{tpu_custom_call.1} parent=1 // pred_check_branch
      %43 = sbr.rel (0) target = $region13
    $region12: #{tpu_custom_call.1} parent=1 // pred_region
      %45 = vsyncadd [#allocation7], 0
      %s46 = sshll.u32 %s2, 4
      %s47 = int_to_ptr.hbm [resolvable:$true] %s46
      %s48 = sshll.u32 [#allocation8], 4
      %s49 = int_to_ptr.vmem [resolvable:$true] %s48
      %54 = dma.hbm_to_vmem [thread:$0]  %s47, 1024, %s49, [#allocation7], 128, 128, 8
    $region13: #{tpu_custom_call.1} parent=1 // pred_fallthru
      _
    // Predicated region
    $region14: #{tpu_custom_call.1} parent=1 // pred_check
      _
    $region15: #{tpu_custom_call.1} parent=1 // pred_check_branch
      %56 = sbr.rel (0) target = $region17
    $region16: #{tpu_custom_call.1} parent=1 // pred_region
      %58 = vsyncadd [#allocation10], 0
      %s59 = sshll.u32 %s3, 4
      %s60 = int_to_ptr.hbm [resolvable:$true] %s59
      %s61 = sshll.u32 [#allocation9], 4
      %s62 = int_to_ptr.vmem [resolvable:$true] %s61
      %67 = dma.hbm_to_vmem [thread:$0]  %s60, 1024, %s62, [#allocation10], 128, 128, 8
    $region17: #{tpu_custom_call.1} parent=1 // pred_fallthru
      _
    // Predicated region
    $region18: #{tpu_custom_call.1} parent=1 // pred_check
      _
    $region19: #{tpu_custom_call.1} parent=1 // pred_check_branch
      %69 = sbr.rel (0) target = $region21
    $region20: #{tpu_custom_call.1} parent=1 // pred_region
      %71 = vsyncadd [#allocation10], 0
      %s72 = sshll.u32 %s4, 4
      %s73 = int_to_ptr.hbm [resolvable:$true] %s72
      %s74 = sshll.u32 [#allocation11], 4
      %s75 = int_to_ptr.vmem [resolvable:$true] %s74
      %80 = dma.hbm_to_vmem [thread:$0]  %s73, 512, %s75, [#allocation10], 64, 64, 4
    $region21: #{tpu_custom_call.1} parent=1 // pred_fallthru
      _
    // Predicated region
    $region22: #{tpu_custom_call.1} parent=1 // pred_check
      _
    $region23: #{tpu_custom_call.1} parent=1 // pred_check_branch
      %82 = sbr.rel (0) target = $region25
    $region24: #{tpu_custom_call.1} parent=1 // pred_region
      %84 = vsyncadd [#allocation13], 0
      %s85 = sshll.u32 %s5, 4
      %s86 = int_to_ptr.hbm [resolvable:$true] %s85
      %s87 = sshll.u32 [#allocation12], 4
      %s88 = int_to_ptr.vmem [resolvable:$true] %s87
      %93 = dma.hbm_to_vmem [thread:$0]  %s86, 512, %s88, [#allocation13], 64, 64, 4
    $region25: #{tpu_custom_call.1} parent=1 // pred_fallthru
      _
    // Predicated region
    $region26: #{tpu_custom_call.1} parent=1 // pred_check
      _
    $region27: #{tpu_custom_call.1} parent=1 // pred_check_branch
      %95 = sbr.rel (0) target = $region29
    $region28: #{tpu_custom_call.1} parent=1 // pred_region
      %97 = dma.done [#allocation4], 2048
    $region29: #{tpu_custom_call.1} parent=1 // pred_fallthru
      _
    // Predicated region
    $region30: #{tpu_custom_call.1} parent=1 // pred_check
      _
    $region31: #{tpu_custom_call.1} parent=1 // pred_check_branch
      %99 = sbr.rel (0) target = $region33
    $region32: #{tpu_custom_call.1} parent=1 // pred_region
      %101 = dma.done [#allocation7], 2048
    $region33: #{tpu_custom_call.1} parent=1 // pred_fallthru
      _
    // Predicated region
    $region34: #{tpu_custom_call.1} parent=1 // pred_check
      _
    $region35: #{tpu_custom_call.1} parent=1 // pred_check_branch
      %103 = sbr.rel (0) target = $region37
    $region36: #{tpu_custom_call.1} parent=1 // pred_region
      %105 = dma.done [#allocation7], 1024
    $region37: #{tpu_custom_call.1} parent=1 // pred_fallthru
      _
    // Predicated region
    $region38: #{tpu_custom_call.1} parent=1 // pred_check
      _
    $region39: #{tpu_custom_call.1} parent=1 // pred_check_branch
      %107 = sbr.rel (0) target = $region41
    $region40: #{tpu_custom_call.1} parent=1 // pred_region
      %109 = dma.done [#allocation10], 1024
    $region41: #{tpu_custom_call.1} parent=1 // pred_fallthru
      _
    // Predicated region
    $region42: #{tpu_custom_call.1} parent=1 // pred_check
      _
    $region43: #{tpu_custom_call.1} parent=1 // pred_check_branch
      %111 = sbr.rel (0) target = $region45
    $region44: #{tpu_custom_call.1} parent=1 // pred_region
      %113 = dma.done [#allocation10], 512
    $region45: #{tpu_custom_call.1} parent=1 // pred_fallthru
      _
    // Predicated region
    $region46: #{tpu_custom_call.1} parent=1 // pred_check
      _
    $region47: #{tpu_custom_call.1} parent=1 // pred_check_branch
      %115 = sbr.rel (0) target = $region49
    $region48: #{tpu_custom_call.1} parent=1 // pred_region
      %117 = dma.done [#allocation13], 512
    $region49: #{tpu_custom_call.1} parent=1 // pred_fallthru
      _
    %p118 = scmp.eq.s32.totalorder 0, 0
    // Predicated region
    $region50: #{tpu_custom_call.1} parent=1 // pred_check
      %p119 = pneg %p118
    $region51: #{tpu_custom_call.1} parent=1 // pred_check_branch
      %121 = sbr.rel (%p119) target = $region53
    $region52: #{tpu_custom_call.1} parent=1 // pred_region
      %s122 = scalar_lea.smem [#allocation2], 0
      %123 = sst [smem:[%s122]] 0.0
    $region53: #{tpu_custom_call.1} parent=1 // pred_fallthru
      _
    %v124 = vld [vmem:[#allocation3] sm:$0xff]
    %v125 = vld [vmem:[#allocation3 + $0x8] sm:$0xff]
    %v126 = vld [vmem:[#allocation3 + $0x10] sm:$0xff]
    %v127 = vld [vmem:[#allocation3 + $0x18] sm:$0xff]
    %v128 = vld [vmem:[#allocation3 + $0x20] sm:$0xff]
    %v129 = vld [vmem:[#allocation3 + $0x28] sm:$0xff]
    %v130 = vld [vmem:[#allocation3 + $0x30] sm:$0xff]
    %v131 = vld [vmem:[#allocation3 + $0x38] sm:$0xff]
    %v132 = vld [vmem:[#allocation3 + $0x40] sm:$0xff]
    %v133 = vld [vmem:[#allocation3 + $0x48] sm:$0xff]
    %v134 = vld [vmem:[#allocation3 + $0x50] sm:$0xff]
    %v135 = vld [vmem:[#allocation3 + $0x58] sm:$0xff]
    %v136 = vld [vmem:[#allocation3 + $0x60] sm:$0xff]
    %v137 = vld [vmem:[#allocation3 + $0x68] sm:$0xff]
    %v138 = vld [vmem:[#allocation3 + $0x70] sm:$0xff]
    %v139 = vld [vmem:[#allocation3 + $0x78] sm:$0xff]
    %v140 = vld [vmem:[#allocation6] sm:$0xff]
    %v141 = vld [vmem:[#allocation6 + $0x8] sm:$0xff]
    %v142 = vld [vmem:[#allocation6 + $0x10] sm:$0xff]
    %v143 = vld [vmem:[#allocation6 + $0x18] sm:$0xff]
    %v144 = vld [vmem:[#allocation6 + $0x20] sm:$0xff]
    %v145 = vld [vmem:[#allocation6 + $0x28] sm:$0xff]
    %v146 = vld [vmem:[#allocation6 + $0x30] sm:$0xff]
    %v147 = vld [vmem:[#allocation6 + $0x38] sm:$0xff]
    %v148 = vld [vmem:[#allocation6 + $0x40] sm:$0xff]
    %v149 = vld [vmem:[#allocation6 + $0x48] sm:$0xff]
    %v150 = vld [vmem:[#allocation6 + $0x50] sm:$0xff]
    %v151 = vld [vmem:[#allocation6 + $0x58] sm:$0xff]
    %v152 = vld [vmem:[#allocation6 + $0x60] sm:$0xff]
    %v153 = vld [vmem:[#allocation6 + $0x68] sm:$0xff]
    %v154 = vld [vmem:[#allocation6 + $0x70] sm:$0xff]
    %v155 = vld [vmem:[#allocation6 + $0x78] sm:$0xff]
    %v156 = vsub.f32 %v124, %v140
    %v157 = vsub.f32 %v125, %v141
    %v158 = vsub.f32 %v126, %v142
    %v159 = vsub.f32 %v127, %v143
    %v160 = vsub.f32 %v128, %v144
    %v161 = vsub.f32 %v129, %v145
    %v162 = vsub.f32 %v130, %v146
    %v163 = vsub.f32 %v131, %v147
    %v164 = vsub.f32 %v132, %v148
    %v165 = vsub.f32 %v133, %v149
    %v166 = vsub.f32 %v134, %v150
    %v167 = vsub.f32 %v135, %v151
    %v168 = vsub.f32 %v136, %v152
    %v169 = vsub.f32 %v137, %v153
    %v170 = vsub.f32 %v138, %v154
    %v171 = vsub.f32 %v139, %v155
    %v172 = vand.u32 2147483647, %v156
    %v173 = vand.u32 2147483647, %v157
    %v174 = vand.u32 2147483647, %v158
    %v175 = vand.u32 2147483647, %v159
    %v176 = vand.u32 2147483647, %v160
    %v177 = vand.u32 2147483647, %v161
    %v178 = vand.u32 2147483647, %v162
    %v179 = vand.u32 2147483647, %v163
    %v180 = vand.u32 2147483647, %v164
    %v181 = vand.u32 2147483647, %v165
    %v182 = vand.u32 2147483647, %v166
    %v183 = vand.u32 2147483647, %v167
    %v184 = vand.u32 2147483647, %v168
    %v185 = vand.u32 2147483647, %v169
    %v186 = vand.u32 2147483647, %v170
    %v187 = vand.u32 2147483647, %v171
    %vm188 = vcmask 130048
    %v189 = vsel %vm188, %v172, 0.0
    %v190 = vsel %vm188, %v174, 0.0
    %v191 = vadd.f32 %v189, %v190
    %v192 = vsel %vm188, %v176, 0.0
    %v193 = vadd.f32 %v191, %v192
    %v194 = vsel %vm188, %v178, 0.0
    %v195 = vadd.f32 %v193, %v194
    %v196 = vsel %vm188, %v180, 0.0
    %v197 = vadd.f32 %v195, %v196
    %v198 = vsel %vm188, %v182, 0.0
    %v199 = vadd.f32 %v197, %v198
    %v200 = vsel %vm188, %v184, 0.0
    %v201 = vadd.f32 %v199, %v200
    %v202 = vsel %vm188, %v186, 0.0
    %v203 = vadd.f32 %v201, %v202
    %v204 = vsel %vm188, %v173, 0.0
    %v205 = vsel %vm188, %v175, 0.0
    %v206 = vadd.f32 %v204, %v205
    %v207 = vsel %vm188, %v177, 0.0
    %v208 = vadd.f32 %v206, %v207
    %v209 = vsel %vm188, %v179, 0.0
    %v210 = vadd.f32 %v208, %v209
    %v211 = vsel %vm188, %v181, 0.0
    %v212 = vadd.f32 %v210, %v211
    %v213 = vsel %vm188, %v183, 0.0
    %v214 = vadd.f32 %v212, %v213
    %v215 = vsel %vm188, %v185, 0.0
    %v216 = vadd.f32 %v214, %v215
    %v217 = vsel %vm188, %v187, 0.0
    %v218 = vadd.f32 %v216, %v217
    %v219 = vsel %vm188, %v203, 0.0
    %v220 = vsel %vm188, %v218, 0.0
    %v221 = vadd.f32 %v219, %v220
    %222 = vadd.xlane.f32.xlu0 %v221
    %v223 = vpop.xlane.xlu0 %222
    %v224 = vrot.slane %v223, 4
    %v225 = vadd.f32 %v223, %v224
    %v226 = vrot.slane %v225, 2
    %v227 = vadd.f32 %v225, %v226
    %v228 = vrot.slane %v227, 1
    %v229 = vadd.f32 %v227, %v228
    %s230 = vtos %v229
    %v231 = vld [vmem:[#allocation8] sm:$0xff]
    %v232 = vld [vmem:[#allocation8 + $0x8] sm:$0xff]
    %v233 = vld [vmem:[#allocation8 + $0x10] sm:$0xff]
    %v234 = vld [vmem:[#allocation8 + $0x18] sm:$0xff]
    %v235 = vld [vmem:[#allocation8 + $0x20] sm:$0xff]
    %v236 = vld [vmem:[#allocation8 + $0x28] sm:$0xff]
    %v237 = vld [vmem:[#allocation8 + $0x30] sm:$0xff]
    %v238 = vld [vmem:[#allocation8 + $0x38] sm:$0xff]
    %v239 = vld [vmem:[#allocation9] sm:$0xff]
    %v240 = vld [vmem:[#allocation9 + $0x8] sm:$0xff]
    %v241 = vld [vmem:[#allocation9 + $0x10] sm:$0xff]
    %v242 = vld [vmem:[#allocation9 + $0x18] sm:$0xff]
    %v243 = vld [vmem:[#allocation9 + $0x20] sm:$0xff]
    %v244 = vld [vmem:[#allocation9 + $0x28] sm:$0xff]
    %v245 = vld [vmem:[#allocation9 + $0x30] sm:$0xff]
    %v246 = vld [vmem:[#allocation9 + $0x38] sm:$0xff]
    %v247 = vsub.f32 %v231, %v239
    %v248 = vsub.f32 %v232, %v240
    %v249 = vsub.f32 %v233, %v241
    %v250 = vsub.f32 %v234, %v242
    %v251 = vsub.f32 %v235, %v243
    %v252 = vsub.f32 %v236, %v244
    %v253 = vsub.f32 %v237, %v245
    %v254 = vsub.f32 %v238, %v246
    %v255 = vand.u32 2147483647, %v247
    %v256 = vand.u32 2147483647, %v248
    %v257 = vand.u32 2147483647, %v249
    %v258 = vand.u32 2147483647, %v250
    %v259 = vand.u32 2147483647, %v251
    %v260 = vand.u32 2147483647, %v252
    %v261 = vand.u32 2147483647, %v253
    %v262 = vand.u32 2147483647, %v254
    %vm263 = vcmask 64512
    %v264 = vsel %vm263, %v255, 0.0
    %v265 = vsel %vm263, %v256, 0.0
    %v266 = vadd.f32 %v264, %v265
    %v267 = vsel %vm263, %v257, 0.0
    %v268 = vadd.f32 %v266, %v267
    %v269 = vsel %vm263, %v258, 0.0
    %v270 = vadd.f32 %v268, %v269
    %v271 = vsel %vm263, %v259, 0.0
    %v272 = vadd.f32 %v270, %v271
    %v273 = vsel %vm263, %v260, 0.0
    %v274 = vadd.f32 %v272, %v273
    %v275 = vsel %vm263, %v261, 0.0
    %v276 = vadd.f32 %v274, %v275
    %v277 = vsel %vm263, %v262, 0.0
    %v278 = vadd.f32 %v276, %v277
    %v279 = vsel %vm263, %v278, 0.0
    %280 = vadd.xlane.f32.xlu0 %v279
    %v281 = vpop.xlane.xlu0 %280
    %v282 = vrot.slane %v281, 4
    %v283 = vadd.f32 %v281, %v282
    %v284 = vrot.slane %v283, 2
    %v285 = vadd.f32 %v283, %v284
    %v286 = vrot.slane %v285, 1
    %v287 = vadd.f32 %v285, %v286
    %s288 = vtos %v287
    %s289 = smul.f32 %s288, 2.0
    %s290 = sadd.f32 %s230, %s289
    %v291 = vld [vmem:[#allocation11] sm:$0xf]
    %v292 = vld [vmem:[#allocation11 + $0x4] sm:$0xf]
    %v293 = vld [vmem:[#allocation11 + $0x8] sm:$0xf]
    %v294 = vld [vmem:[#allocation11 + $0xc] sm:$0xf]
    %v295 = vld [vmem:[#allocation11 + $0x10] sm:$0xf]
    %v296 = vld [vmem:[#allocation11 + $0x14] sm:$0xf]
    %v297 = vld [vmem:[#allocation11 + $0x18] sm:$0xf]
    %v298 = vld [vmem:[#allocation11 + $0x1c] sm:$0xf]
    %v299 = vld [vmem:[#allocation12] sm:$0xf]
    %v300 = vld [vmem:[#allocation12 + $0x4] sm:$0xf]
    %v301 = vld [vmem:[#allocation12 + $0x8] sm:$0xf]
    %v302 = vld [vmem:[#allocation12 + $0xc] sm:$0xf]
    %v303 = vld [vmem:[#allocation12 + $0x10] sm:$0xf]
    %v304 = vld [vmem:[#allocation12 + $0x14] sm:$0xf]
    %v305 = vld [vmem:[#allocation12 + $0x18] sm:$0xf]
    %v306 = vld [vmem:[#allocation12 + $0x1c] sm:$0xf]
    %v307 = vsub.f32 %v291, %v299
    %v308 = vsub.f32 %v292, %v300
    %v309 = vsub.f32 %v293, %v301
    %v310 = vsub.f32 %v294, %v302
    %v311 = vsub.f32 %v295, %v303
    %v312 = vsub.f32 %v296, %v304
    %v313 = vsub.f32 %v297, %v305
    %v314 = vsub.f32 %v298, %v306
    %v315 = vand.u32 2147483647, %v307
    %v316 = vand.u32 2147483647, %v308
    %v317 = vand.u32 2147483647, %v309
    %v318 = vand.u32 2147483647, %v310
    %v319 = vand.u32 2147483647, %v311
    %v320 = vand.u32 2147483647, %v312
    %v321 = vand.u32 2147483647, %v313
    %v322 = vand.u32 2147483647, %v314
    %vm323 = vcmask 27648
    %v324 = vsel %vm323, %v315, 0.0
    %v325 = vsel %vm323, %v316, 0.0
    %v326 = vadd.f32 %v324, %v325
    %v327 = vsel %vm323, %v317, 0.0
    %v328 = vadd.f32 %v326, %v327
    %v329 = vsel %vm323, %v318, 0.0
    %v330 = vadd.f32 %v328, %v329
    %v331 = vsel %vm323, %v319, 0.0
    %v332 = vadd.f32 %v330, %v331
    %v333 = vsel %vm323, %v320, 0.0
    %v334 = vadd.f32 %v332, %v333
    %v335 = vsel %vm323, %v321, 0.0
    %v336 = vadd.f32 %v334, %v335
    %v337 = vsel %vm323, %v322, 0.0
    %v338 = vadd.f32 %v336, %v337
    %v339 = vsel %vm323, %v338, 0.0
    %340 = vadd.xlane.f32.xlu0 %v339
    %v341 = vpop.xlane.xlu0 %340
    %v342 = vrot.slane %v341, 4
    %v343 = vadd.f32 %v341, %v342
    %v344 = vrot.slane %v343, 2
    %v345 = vadd.f32 %v343, %v344
    %v346 = vrot.slane %v345, 1
    %v347 = vadd.f32 %v345, %v346
    %s348 = vtos %v347
    %s349 = smul.f32 %s348, 4.0
    %s350 = sadd.f32 %s290, %s349
    %s351 = sld [smem:[#allocation2]]
    %s352 = sadd.f32 %s351, %s350
    %s353 = scalar_lea.smem [#allocation2], 0
    %354 = sst [smem:[%s353]] %s352
    // Predicated region
    $region54: #{tpu_custom_call.1} parent=1 // pred_check
      %p355 = pneg %p118
    $region55: #{tpu_custom_call.1} parent=1 // pred_check_branch
      %357 = sbr.rel (%p355) target = $region57
    $region56: #{tpu_custom_call.1} parent=1 // pred_region
      %s358 = sld [smem:[#allocation2]]
      %s359 = smul.f32 %s358, 0.5
      %s360 = scalar_lea.smem [#allocation14], 0
      %361 = sst [smem:[%s360]] %s359
    $region57: #{tpu_custom_call.1} parent=1 // pred_fallthru
      _
    // Predicated region
    $region58: #{tpu_custom_call.1} parent=1 // pred_check
      _
    $region59: #{tpu_custom_call.1} parent=1 // pred_check_branch
      %363 = sbr.rel (0) target = $region61
    $region60: #{tpu_custom_call.1} parent=1 // pred_region
      %365 = vsyncadd [#allocation5], 0
      %s367 = sshll.u32 %s6, 4
      %s368 = int_to_ptr.hbm [resolvable:$true] %s367
      %370 = dma.smem_to_hbm [#allocation14], 16, %s368, [#allocation5]
    $region61: #{tpu_custom_call.1} parent=1 // pred_fallthru
      _
    // Predicated region
    $region62: #{tpu_custom_call.1} parent=1 // pred_check
      _
    $region63: #{tpu_custom_call.1} parent=1 // pred_check_branch
      %372 = sbr.rel (0) target = $region65
    $region64: #{tpu_custom_call.1} parent=1 // pred_region
      %374 = dma.done [#allocation5], 16
    $region65: #{tpu_custom_call.1} parent=1 // pred_fallthru
      _
    %375 = sfence
    %376 = vsyncpa [#allocation4], 1
    %377 = vsyncpa [#allocation7], 1
    %378 = vsyncpa [#allocation10], 1
    %379 = vsyncpa [#allocation13], 1
    %380 = vsyncpa [#allocation5], 1

</llo_original>
